<compile_context>
chip_gen: v5e
topology: v5e:2x2
jax: 0.10.0
libtpu: 0.0.40
codegen_flags: <defaults>
</compile_context>

<pallas_src>
import functools

import jax
import jax.numpy as jnp
from jax.experimental import pallas as pl
from jax.experimental.pallas import tpu as pltpu

EPS = 1e-5
_LANES = 128


def layernorm_kernel(x_ref, w_ref, b_ref, o_ref):
    """Generic path: one LayerNorm row per tile row (last dim = D)."""
    x = x_ref[...]
    if x.dtype != jnp.float32:
        x = x.astype(jnp.float32)  # reductions in f32 (mandatory on v5e)
    d = x.shape[-1]
    mean = jnp.mean(x, axis=-1, keepdims=True)
    diff = x - mean
    # torch.std defaults to unbiased (ddof=1) -> divide by (D - 1)
    var = jnp.sum(diff * diff, axis=-1, keepdims=True) * (1.0 / (d - 1))
    # Reference adds eps to the std (not to var); exact reciprocal (EUP slot).
    inv = pl.reciprocal(jnp.sqrt(var) + EPS, approx=False)
    o_ref[...] = ((diff * inv) * w_ref[...] + b_ref[...]).astype(o_ref.dtype)


def layernorm_packed_kernel(x_ref, w_ref, b_ref, o_ref, *, d, pack):
    """Lane-dense path: each 128-lane row holds `pack = 128 // d` independent
    D-element LayerNorm rows, so every load/store uses all 128 lanes."""
    x = x_ref[...]
    if x.dtype != jnp.float32:
        x = x.astype(jnp.float32)
    parts = []
    for g in range(pack):  # static small unroll (pack <= 16), exact f32 math
        xg = x[:, g * d:(g + 1) * d]
        mean = jnp.mean(xg, axis=-1, keepdims=True)
        diff = xg - mean
        var = jnp.sum(diff * diff, axis=-1, keepdims=True) * (1.0 / (d - 1))
        inv = pl.reciprocal(jnp.sqrt(var) + EPS, approx=False)
        parts.append(diff * inv)
    norm = jnp.concatenate(parts, axis=-1)  # (tm, 128), lane-dense
    o_ref[...] = (norm * w_ref[...] + b_ref[...]).astype(o_ref.dtype)


def _sublane_granularity(dtype) -> int:
    itemsize = jnp.dtype(dtype).itemsize
    return {4: 8, 2: 16, 1: 32}.get(itemsize, 8)


def _vmem_budget():
    """(vmem_limit_bytes, tile_budget_bytes), sized per TPU generation."""
    try:
        cap = pltpu.get_tpu_info().vmem_capacity_bytes
    except Exception:
        cap = 64 * 1024 * 1024  # conservative fallback (v7x-sized)
    # ~5/8 of physical VMEM for this pallas_call, capped at 80 MiB:
    #   v7x   (64 MiB)  -> 40 MiB limit, 20 MiB tile budget
    #   v5e/v6e (128 MiB) -> 80 MiB limit, 40 MiB tile budget
    vmem_limit = min((cap * 5) // 8, 80 * 1024 * 1024)
    return int(vmem_limit), int(vmem_limit) // 2


def _choose_block_rows(rows: int, lane_d: int, dtype, budget: int, gran: int) -> int:
    """Largest row tile under `budget`: 2x input + 2x output double buffers
    plus ~3 f32 temporaries materialized in the body."""
    itemsize = jnp.dtype(dtype).itemsize
    per_row = lane_d * (4 * itemsize + 3 * 4)
    block = budget // max(per_row, 1)
    block = min(block, 4096)
    block = max(gran, (block // gran) * gran)
    if rows <= block:
        return rows  # single full block: always a legal block shape
    return block


def layer_norm(x, weight, bias, *, block_rows=None, vmem_limit_bytes=None):
    """x: (..., D); weight, bias: (D,).
    Matches the torch module: (x - mean) / (std_unbiased + eps) * w + b."""
    orig_shape = x.shape
    d = orig_shape[-1]
    if d < 2:
        raise ValueError("unbiased std (ddof=1) requires emb_dim >= 2")
    x2 = x.reshape(-1, d)
    rows = x2.shape[0]

    # Hoist parameter casts out of the kernel (done once on D elements).
    w32 = weight.astype(jnp.float32)
    b32 = bias.astype(jnp.float32)

    # Lane-dense packing for small D (free metadata reshape, no HBM copy).
    pack = _LANES // d if (d < _LANES and _LANES % d == 0) else 1
    if pack > 1 and rows % pack == 0:
        rows_p = rows // pack
        lane_d = _LANES
        x_in = x2.reshape(rows_p, lane_d)
        w_in = jnp.tile(w32, pack).reshape(1, lane_d)
        b_in = jnp.tile(b32, pack).reshape(1, lane_d)
        kernel = functools.partial(layernorm_packed_kernel, d=d, pack=pack)
    else:
        rows_p = rows
        lane_d = d
        x_in = x2
        w_in = w32.reshape(1, d)
        b_in = b32.reshape(1, d)
        kernel = layernorm_kernel

    gran = _sublane_granularity(x.dtype)
    auto_limit, tile_budget = _vmem_budget()
    if vmem_limit_bytes is None:
        vmem_limit_bytes = auto_limit
    if block_rows is None:
        block_rows = _choose_block_rows(rows_p, lane_d, x.dtype, tile_budget, gran)
    else:
        block_rows = max(1, min(block_rows, rows_p))
        if block_rows < rows_p:
            block_rows = max(gran, (block_rows // gran) * gran)

    # No padding round-trip: a partial trailing row block (rows_p % block_rows
    # != 0) is handled by Pallas with masked stores on the last grid step.
    num_blocks = pl.cdiv(rows_p, block_rows)

    out = pl.pallas_call(
        kernel,
        out_shape=jax.ShapeDtypeStruct((rows_p, lane_d), x.dtype),
        grid_spec=pltpu.PrefetchScalarGridSpec(
            num_scalar_prefetch=0,
            grid=(num_blocks,),
            in_specs=[
                pl.BlockSpec((block_rows, lane_d), lambda i: (i, 0)),
                pl.BlockSpec((1, lane_d), lambda i: (0, 0)),
                pl.BlockSpec((1, lane_d), lambda i: (0, 0)),
            ],
            out_specs=pl.BlockSpec((block_rows, lane_d), lambda i: (i, 0)),
        ),
        compiler_params=pltpu.CompilerParams(
            dimension_semantics=("parallel",),
            vmem_limit_bytes=vmem_limit_bytes,
        ),
    )(x_in, w_in, b_in)

    return out.reshape(orig_shape)


def _reference(x, weight, bias):
    d = x.shape[-1]
    mean = jnp.mean(x, axis=-1, keepdims=True)
    std = jnp.sqrt(jnp.sum((x - mean) ** 2, axis=-1, keepdims=True) / (d - 1))
    return (x - mean) / (std + EPS) * weight + bias


if __name__ == "__main__":
    cfg = {"emb_dim": 32}
    batch, seq = 2, 8
    key = jax.random.PRNGKey(0)
    x = jax.random.normal(key, (batch, seq, cfg["emb_dim"]), dtype=jnp.float32)

    # deterministic parameter init matching nn.Parameter(ones/zeros)
    weight = jnp.ones((cfg["emb_dim"],), dtype=jnp.float32)
    bias = jnp.zeros((cfg["emb_dim"],), dtype=jnp.float32)

    # Lane-dense packed path (rows = 16 divisible by 128 // 32 = 4).
    y = layer_norm(x, weight, bias)
    jax.block_until_ready(y)
    assert jnp.allclose(y, _reference(x, weight, bias), atol=1e-5, rtol=1e-5)

    # Ragged row count (15 rows) -> exercises the generic fallback kernel.
    x_odd = jax.random.normal(jax.random.PRNGKey(0), (3, 5, cfg["emb_dim"]),
                              dtype=jnp.float32)
    y_odd = layer_norm(x_odd, weight, bias)
    jax.block_until_ready(y_odd)
    assert jnp.allclose(y_odd, _reference(x_odd, weight, bias),
                        atol=1e-5, rtol=1e-5)

    print("KERNEL_OK")
</pallas_src>

<mosaic_0001>
module attributes {stable_mosaic.version = 11 : i64} {
  func.func @layernorm_packed_kernel(%arg0: i32, %arg1: memref<4x128xf32, #tpu.memory_space<vmem>>, %arg2: memref<1x128xf32, #tpu.memory_space<vmem>>, %arg3: memref<1x128xf32, #tpu.memory_space<vmem>>, %arg4: memref<4x128xf32, #tpu.memory_space<vmem>>) attributes {dimension_semantics = [#tpu.dimension_semantics<parallel>], iteration_bounds = array<i64: 1>, scalar_prefetch = 0 : i64, scratch_operands = 0 : i64, tpu.core_type = #tpu.core_type<tc>, window_params = [{transform_indices = @transform_0, window_bounds = array<i64: 4, 128>}, {pipeline_mode = #tpu.pipeline_mode<synchronous>, transform_indices = @transform_1, window_bounds = array<i64: 1, 128>}, {pipeline_mode = #tpu.pipeline_mode<synchronous>, transform_indices = @transform_2, window_bounds = array<i64: 1, 128>}, {transform_indices = @transform_3, window_bounds = array<i64: 4, 128>}]} {
    %c0 = arith.constant 0 : index
    %c0_0 = arith.constant 0 : index
    %0 = vector.load %arg1[%c0, %c0_0] : memref<4x128xf32, #tpu.memory_space<vmem>>, vector<4x128xf32>
    %1 = vector.extract_strided_slice %0 {offsets = [0, 0], sizes = [4, 32], strides = [1, 1]} : vector<4x128xf32> to vector<4x32xf32>
    %cst = arith.constant dense<0.000000e+00> : vector<4xf32>
    %2 = vector.multi_reduction <add>, %1, %cst [1] : vector<4x32xf32> to vector<4xf32>
    %3 = vector.shape_cast %2 : vector<4xf32> to vector<4x1xf32>
    %cst_1 = arith.constant 3.200000e+01 : f32
    %4 = vector.broadcast %cst_1 : f32 to vector<4x1xf32>
    %5 = arith.divf %3, %4 : vector<4x1xf32>
    %6 = vector.broadcast %5 : vector<4x1xf32> to vector<4x32xf32>
    %7 = arith.subf %1, %6 : vector<4x32xf32>
    %8 = arith.mulf %7, %7 : vector<4x32xf32>
    %cst_2 = arith.constant dense<0.000000e+00> : vector<4xf32>
    %9 = vector.multi_reduction <add>, %8, %cst_2 [1] : vector<4x32xf32> to vector<4xf32>
    %10 = vector.shape_cast %9 : vector<4xf32> to vector<4x1xf32>
    %cst_3 = arith.constant 0.0322580636 : f32
    %11 = vector.broadcast %cst_3 : f32 to vector<4x1xf32>
    %12 = arith.mulf %10, %11 : vector<4x1xf32>
    %13 = math.sqrt %12 : vector<4x1xf32>
    %cst_4 = arith.constant 9.99999974E-6 : f32
    %14 = vector.broadcast %cst_4 : f32 to vector<4x1xf32>
    %15 = arith.addf %13, %14 : vector<4x1xf32>
    %16 = tpu.reciprocal %15 : vector<4x1xf32> -> vector<4x1xf32>
    %17 = vector.broadcast %16 : vector<4x1xf32> to vector<4x32xf32>
    %18 = arith.mulf %7, %17 : vector<4x32xf32>
    %19 = vector.extract_strided_slice %0 {offsets = [0, 32], sizes = [4, 32], strides = [1, 1]} : vector<4x128xf32> to vector<4x32xf32>
    %cst_5 = arith.constant dense<0.000000e+00> : vector<4xf32>
    %20 = vector.multi_reduction <add>, %19, %cst_5 [1] : vector<4x32xf32> to vector<4xf32>
    %21 = vector.shape_cast %20 : vector<4xf32> to vector<4x1xf32>
    %cst_6 = arith.constant 3.200000e+01 : f32
    %22 = vector.broadcast %cst_6 : f32 to vector<4x1xf32>
    %23 = arith.divf %21, %22 : vector<4x1xf32>
    %24 = vector.broadcast %23 : vector<4x1xf32> to vector<4x32xf32>
    %25 = arith.subf %19, %24 : vector<4x32xf32>
    %26 = arith.mulf %25, %25 : vector<4x32xf32>
    %cst_7 = arith.constant dense<0.000000e+00> : vector<4xf32>
    %27 = vector.multi_reduction <add>, %26, %cst_7 [1] : vector<4x32xf32> to vector<4xf32>
    %28 = vector.shape_cast %27 : vector<4xf32> to vector<4x1xf32>
    %cst_8 = arith.constant 0.0322580636 : f32
    %29 = vector.broadcast %cst_8 : f32 to vector<4x1xf32>
    %30 = arith.mulf %28, %29 : vector<4x1xf32>
    %31 = math.sqrt %30 : vector<4x1xf32>
    %cst_9 = arith.constant 9.99999974E-6 : f32
    %32 = vector.broadcast %cst_9 : f32 to vector<4x1xf32>
    %33 = arith.addf %31, %32 : vector<4x1xf32>
    %34 = tpu.reciprocal %33 : vector<4x1xf32> -> vector<4x1xf32>
    %35 = vector.broadcast %34 : vector<4x1xf32> to vector<4x32xf32>
    %36 = arith.mulf %25, %35 : vector<4x32xf32>
    %37 = vector.extract_strided_slice %0 {offsets = [0, 64], sizes = [4, 32], strides = [1, 1]} : vector<4x128xf32> to vector<4x32xf32>
    %cst_10 = arith.constant dense<0.000000e+00> : vector<4xf32>
    %38 = vector.multi_reduction <add>, %37, %cst_10 [1] : vector<4x32xf32> to vector<4xf32>
    %39 = vector.shape_cast %38 : vector<4xf32> to vector<4x1xf32>
    %cst_11 = arith.constant 3.200000e+01 : f32
    %40 = vector.broadcast %cst_11 : f32 to vector<4x1xf32>
    %41 = arith.divf %39, %40 : vector<4x1xf32>
    %42 = vector.broadcast %41 : vector<4x1xf32> to vector<4x32xf32>
    %43 = arith.subf %37, %42 : vector<4x32xf32>
    %44 = arith.mulf %43, %43 : vector<4x32xf32>
    %cst_12 = arith.constant dense<0.000000e+00> : vector<4xf32>
    %45 = vector.multi_reduction <add>, %44, %cst_12 [1] : vector<4x32xf32> to vector<4xf32>
    %46 = vector.shape_cast %45 : vector<4xf32> to vector<4x1xf32>
    %cst_13 = arith.constant 0.0322580636 : f32
    %47 = vector.broadcast %cst_13 : f32 to vector<4x1xf32>
    %48 = arith.mulf %46, %47 : vector<4x1xf32>
    %49 = math.sqrt %48 : vector<4x1xf32>
    %cst_14 = arith.constant 9.99999974E-6 : f32
    %50 = vector.broadcast %cst_14 : f32 to vector<4x1xf32>
    %51 = arith.addf %49, %50 : vector<4x1xf32>
    %52 = tpu.reciprocal %51 : vector<4x1xf32> -> vector<4x1xf32>
    %53 = vector.broadcast %52 : vector<4x1xf32> to vector<4x32xf32>
    %54 = arith.mulf %43, %53 : vector<4x32xf32>
    %55 = vector.extract_strided_slice %0 {offsets = [0, 96], sizes = [4, 32], strides = [1, 1]} : vector<4x128xf32> to vector<4x32xf32>
    %cst_15 = arith.constant dense<0.000000e+00> : vector<4xf32>
    %56 = vector.multi_reduction <add>, %55, %cst_15 [1] : vector<4x32xf32> to vector<4xf32>
    %57 = vector.shape_cast %56 : vector<4xf32> to vector<4x1xf32>
    %cst_16 = arith.constant 3.200000e+01 : f32
    %58 = vector.broadcast %cst_16 : f32 to vector<4x1xf32>
    %59 = arith.divf %57, %58 : vector<4x1xf32>
    %60 = vector.broadcast %59 : vector<4x1xf32> to vector<4x32xf32>
    %61 = arith.subf %55, %60 : vector<4x32xf32>
    %62 = arith.mulf %61, %61 : vector<4x32xf32>
    %cst_17 = arith.constant dense<0.000000e+00> : vector<4xf32>
    %63 = vector.multi_reduction <add>, %62, %cst_17 [1] : vector<4x32xf32> to vector<4xf32>
    %64 = vector.shape_cast %63 : vector<4xf32> to vector<4x1xf32>
    %cst_18 = arith.constant 0.0322580636 : f32
    %65 = vector.broadcast %cst_18 : f32 to vector<4x1xf32>
    %66 = arith.mulf %64, %65 : vector<4x1xf32>
    %67 = math.sqrt %66 : vector<4x1xf32>
    %cst_19 = arith.constant 9.99999974E-6 : f32
    %68 = vector.broadcast %cst_19 : f32 to vector<4x1xf32>
    %69 = arith.addf %67, %68 : vector<4x1xf32>
    %70 = tpu.reciprocal %69 : vector<4x1xf32> -> vector<4x1xf32>
    %71 = vector.broadcast %70 : vector<4x1xf32> to vector<4x32xf32>
    %72 = arith.mulf %61, %71 : vector<4x32xf32>
    %73 = tpu.concatenate %18, %36, %54, %72 in 1 : vector<4x32xf32>, vector<4x32xf32>, vector<4x32xf32>, vector<4x32xf32> -> vector<4x128xf32>
    %c0_20 = arith.constant 0 : index
    %c0_21 = arith.constant 0 : index
    %74 = vector.load %arg2[%c0_20, %c0_21] : memref<1x128xf32, #tpu.memory_space<vmem>>, vector<1x128xf32>
    %75 = vector.broadcast %74 : vector<1x128xf32> to vector<4x128xf32>
    %76 = arith.mulf %73, %75 : vector<4x128xf32>
    %c0_22 = arith.constant 0 : index
    %c0_23 = arith.constant 0 : index
    %77 = vector.load %arg3[%c0_22, %c0_23] : memref<1x128xf32, #tpu.memory_space<vmem>>, vector<1x128xf32>
    %78 = vector.broadcast %77 : vector<1x128xf32> to vector<4x128xf32>
    %79 = arith.addf %76, %78 : vector<4x128xf32>
    %c0_24 = arith.constant 0 : index
    %c0_25 = arith.constant 0 : index
    %80 = vector.load %arg4[%c0_24, %c0_25] : memref<4x128xf32, #tpu.memory_space<vmem>>, vector<4x128xf32>
    tpu.vector_store %arg4[%c0_24, %c0_25], %79 {strides = array<i32>} : memref<4x128xf32, #tpu.memory_space<vmem>>, vector<4x128xf32>,
    return
  }
  func.func @transform_0(%arg0: i32) -> (i32, i32) {
    %c0_i32 = arith.constant 0 : i32
    %c0_i32_0 = arith.constant 0 : i32
    return %arg0, %c0_i32 : i32, i32
  }
  func.func @transform_1(%arg0: i32) -> (i32, i32) {
    %c0_i32 = arith.constant 0 : i32
    %c0_i32_0 = arith.constant 0 : i32
    %c0_i32_1 = arith.constant 0 : i32
    return %c0_i32, %c0_i32_0 : i32, i32
  }
  func.func @transform_2(%arg0: i32) -> (i32, i32) {
    %c0_i32 = arith.constant 0 : i32
    %c0_i32_0 = arith.constant 0 : i32
    %c0_i32_1 = arith.constant 0 : i32
    return %c0_i32, %c0_i32_0 : i32, i32
  }
  func.func @transform_3(%arg0: i32) -> (i32, i32) {
    %c0_i32 = arith.constant 0 : i32
    %c0_i32_0 = arith.constant 0 : i32
    return %arg0, %c0_i32 : i32, i32
  }
}

</mosaic_0001>

<llo_original>
// kernel: tpu_custom_call.1
$region0: #{tpu_custom_call.1}
  #allocation0 [shape = 'u32[]', space=smem, size = 0x4, offset = 0x4, fixed_abs, tag = 'smem constant byte address 0x4 - core index']
  #allocation1 [shape = 'u32[72,128]{1,0:T(1,128)}', space=vmem, size = 0x9000, scoped, tag = 'internal scratch']
  %s0 = inlined_call_operand.hbm [shape: f32[4,128], index: 0, kind: input, shape index: {}]
  %s1 = inlined_call_operand.hbm [shape: f32[1,128], index: 1, kind: input, shape index: {}]
  %s2 = inlined_call_operand.vmem [shape: f32[1,128], index: 2, kind: input, shape index: {}]
  %s3 = inlined_call_operand.hbm [shape: f32[4,128], index: 3, kind: output, shape index: {}]
  %s4 = sld [smem:[#allocation0]]
  $region30: #{tpu_custom_call.1} parent=0
    _
  %s6 = ssub.s32 1, %s4
  %s7 = scalar_select 0, %s6, %s4
  $region1: #{tpu_custom_call.1} parent=0
    #allocation2 [shape = 'u8[2048]{0}', space=vmem, size = 0x800, scoped, tag = 'input window, operand 0, single buffered']
    #allocation3 [shape = 's32[1]{0}', space=sflag, size = 0x4, scoped, tag = 'scoped memory for tpu_custom_call.1']
    #allocation4 [shape = 's32[1]{0}', space=sflag, size = 0x4, scoped, tag = 'scoped memory for tpu_custom_call.1']
    #allocation5 [shape = 'u8[512]{0}', space=vmem, size = 0x400, scoped, tag = 'input window, operand 1, single buffered']
    #allocation6 [shape = 's32[1]{0}', space=sflag, size = 0x4, scoped, tag = 'scoped memory for tpu_custom_call.1']
    #allocation7 [shape = 'u8[2048]{0}', space=vmem, size = 0x800, scoped, tag = 'output window, operand 0, single buffered']
    %8 = vsyncpa [#allocation3], 0
    %9 = vsyncpa [#allocation6], 0
    %10 = vsyncpa [#allocation4], 0
    // Predicated region
    $region2: #{tpu_custom_call.1} parent=1 // pred_check
      _
    $region3: #{tpu_custom_call.1} parent=1 // pred_check_branch
      %12 = sbr.rel (0) target = $region5
    $region4: #{tpu_custom_call.1} parent=1 // pred_region
      %14 = vsyncadd [#allocation3], 0
      %s16 = sshll.u32 %s0, 4
      %s17 = int_to_ptr.hbm [resolvable:$true] %s16
      %s18 = sshll.u32 [#allocation2], 4
      %s19 = int_to_ptr.vmem [resolvable:$true] %s18
      %21 = dma.hbm_to_vmem [thread:$0]  %s17, 64, %s19, [#allocation3]
    $region5: #{tpu_custom_call.1} parent=1 // pred_fallthru
      _
    // Predicated region
    $region6: #{tpu_custom_call.1} parent=1 // pred_check
      _
    $region7: #{tpu_custom_call.1} parent=1 // pred_check_branch
      %23 = sbr.rel (0) target = $region9
    $region8: #{tpu_custom_call.1} parent=1 // pred_region
      %25 = vsyncadd [#allocation6], 0
      %s27 = sshll.u32 %s1, 4
      %s28 = int_to_ptr.hbm [resolvable:$true] %s27
      %s29 = sshll.u32 [#allocation5], 4
      %s30 = int_to_ptr.vmem [resolvable:$true] %s29
      %32 = dma.hbm_to_vmem [thread:$0]  %s28, 16, %s30, [#allocation6]
    $region9: #{tpu_custom_call.1} parent=1 // pred_fallthru
      _
    // Predicated region
    $region10: #{tpu_custom_call.1} parent=1 // pred_check
      _
    $region11: #{tpu_custom_call.1} parent=1 // pred_check_branch
      %34 = sbr.rel (0) target = $region13
    $region12: #{tpu_custom_call.1} parent=1 // pred_region
      _
    $region13: #{tpu_custom_call.1} parent=1 // pred_fallthru
      _
    // Predicated region
    $region14: #{tpu_custom_call.1} parent=1 // pred_check
      _
    $region15: #{tpu_custom_call.1} parent=1 // pred_check_branch
      %36 = sbr.rel (0) target = $region17
    $region16: #{tpu_custom_call.1} parent=1 // pred_region
      %38 = dma.done [#allocation3], 64
    $region17: #{tpu_custom_call.1} parent=1 // pred_fallthru
      _
    // Predicated region
    $region18: #{tpu_custom_call.1} parent=1 // pred_check
      _
    $region19: #{tpu_custom_call.1} parent=1 // pred_check_branch
      %40 = sbr.rel (0) target = $region21
    $region20: #{tpu_custom_call.1} parent=1 // pred_region
      %42 = dma.done [#allocation6], 16
    $region21: #{tpu_custom_call.1} parent=1 // pred_fallthru
      _
    %v43 = vld [vmem:[#allocation2] sm:$0xf]
    %vm44 = vcmask 257024
    %v45 = vsel %vm44, %v43, 0.0
    %46 = vadd.xlane.f32.xlu0 %v45
    %v47 = vpop.xlane.xlu0 %46
    %v48 = vrcp.pop 32.0
    %v49 = vmul.f32 32.0, %v48
    %v50 = vsub.f32 1.0, %v49
    %v51 = vmul.f32 %v48, %v50
    %v52 = vadd.f32 %v48, %v51
    %vm53 = vweird.f32 %v48
    %v54 = vsel %vm53, %v48, %v52
    %v55 = vmul.f32 %v47, %v54
    %v56 = vsub.f32 %v43, %v55
    %v57 = vmul.f32 %v56, %v56
    %v58 = vsel %vm44, %v57, 0.0
    %59 = vadd.xlane.f32.xlu0 %v58
    %v60 = vpop.xlane.xlu0 %59
    %v61 = vmul.f32 %v60, 0.032258064
    %v62 = vrsqrt.pop %v61
    %v63 = vmul.f32 %v62, %v61
    %v64 = vmul.f32 %v63, %v62
    %v65 = vmul.f32 0.5, %v64
    %v66 = vsub.f32 1.5, %v65
    %v67 = vmul.f32 %v62, %v66
    %v68 = vmul.f32 %v61, %v67
    %vm69 = vcmp.eq.f32.partialorder %v61, inf
    %v70 = vsel %vm69, %v61, %v68
    %vm71 = vcmp.eq.f32.partialorder %v61, 0.0
    %v72 = vand.u32 %v61, 2147483648
    %v73 = vsel %vm71, %v72, %v70
    %v74 = vadd.f32 %v73, 1e-05
    %v75 = vrcp.pop %v74
    %v76 = vmul.f32 %v74, %v75
    %v77 = vsub.f32 1.0, %v76
    %v78 = vmul.f32 %v75, %v77
    %v79 = vadd.f32 %v75, %v78
    %vm80 = vweird.f32 %v74
    %vm81 = vweird.f32 %v75
    %vm82 = vmor %vm80, %vm81
    %v83 = vsel %vm82, %v75, %v79
    %v84 = vand.u32 2147483647, %v74
    %vm85 = vcmp.eq.f32.partialorder %v84, 8.507059e+37
    %v86 = vand.u32 %v74, 2147483648
    %v87 = vor.u32 1.1754944e-38, %v86
    %v88 = vsel %vm85, %v87, %v83
    %v89 = vmul.f32 %v56, %v88
    %91 = vrot.lane.b32.xlu0 %v43, 96
    %v92 = vpop.permute.xlu0 %91
    %v94 = vsel %vm44, %v92, 0.0
    %95 = vadd.xlane.f32.xlu0 %v94
    %v96 = vpop.xlane.xlu0 %95
    %v97 = vmul.f32 %v96, %v54
    %v98 = vsub.f32 %v43, %v97
    %v99 = vmul.f32 %v98, %v98
    %101 = vrot.lane.b32.xlu0 %v99, 96
    %v102 = vpop.permute.xlu0 %101
    %v104 = vsel %vm44, %v102, 0.0
    %105 = vadd.xlane.f32.xlu0 %v104
    %v106 = vpop.xlane.xlu0 %105
    %v107 = vmul.f32 %v106, 0.032258064
    %v108 = vrsqrt.pop %v107
    %v109 = vmul.f32 %v108, %v107
    %v110 = vmul.f32 %v109, %v108
    %v111 = vmul.f32 0.5, %v110
    %v112 = vsub.f32 1.5, %v111
    %v113 = vmul.f32 %v108, %v112
    %v114 = vmul.f32 %v107, %v113
    %vm115 = vcmp.eq.f32.partialorder %v107, inf
    %v116 = vsel %vm115, %v107, %v114
    %vm117 = vcmp.eq.f32.partialorder %v107, 0.0
    %v118 = vand.u32 %v107, 2147483648
    %v119 = vsel %vm117, %v118, %v116
    %v120 = vadd.f32 %v119, 1e-05
    %v121 = vrcp.pop %v120
    %v122 = vmul.f32 %v120, %v121
    %v123 = vsub.f32 1.0, %v122
    %v124 = vmul.f32 %v121, %v123
    %v125 = vadd.f32 %v121, %v124
    %vm126 = vweird.f32 %v120
    %vm127 = vweird.f32 %v121
    %vm128 = vmor %vm126, %vm127
    %v129 = vsel %vm128, %v121, %v125
    %v130 = vand.u32 2147483647, %v120
    %vm131 = vcmp.eq.f32.partialorder %v130, 8.507059e+37
    %v132 = vand.u32 %v120, 2147483648
    %v133 = vor.u32 1.1754944e-38, %v132
    %v134 = vsel %vm131, %v133, %v129
    %v135 = vmul.f32 %v98, %v134
    %136 = vrot.lane.b32.xlu0 %v43, 64
    %v137 = vpop.permute.xlu0 %136
    %v139 = vsel %vm44, %v137, 0.0
    %140 = vadd.xlane.f32.xlu0 %v139
    %v141 = vpop.xlane.xlu0 %140
    %v142 = vmul.f32 %v141, %v54
    %v143 = vsub.f32 %v43, %v142
    %v144 = vmul.f32 %v143, %v143
    %146 = vrot.lane.b32.xlu0 %v144, 64
    %v147 = vpop.permute.xlu0 %146
    %v149 = vsel %vm44, %v147, 0.0
    %150 = vadd.xlane.f32.xlu0 %v149
    %v151 = vpop.xlane.xlu0 %150
    %v152 = vmul.f32 %v151, 0.032258064
    %v153 = vrsqrt.pop %v152
    %v154 = vmul.f32 %v153, %v152
    %v155 = vmul.f32 %v154, %v153
    %v156 = vmul.f32 0.5, %v155
    %v157 = vsub.f32 1.5, %v156
    %v158 = vmul.f32 %v153, %v157
    %v159 = vmul.f32 %v152, %v158
    %vm160 = vcmp.eq.f32.partialorder %v152, inf
    %v161 = vsel %vm160, %v152, %v159
    %vm162 = vcmp.eq.f32.partialorder %v152, 0.0
    %v163 = vand.u32 %v152, 2147483648
    %v164 = vsel %vm162, %v163, %v161
    %v165 = vadd.f32 %v164, 1e-05
    %v166 = vrcp.pop %v165
    %v167 = vmul.f32 %v165, %v166
    %v168 = vsub.f32 1.0, %v167
    %v169 = vmul.f32 %v166, %v168
    %v170 = vadd.f32 %v166, %v169
    %vm171 = vweird.f32 %v165
    %vm172 = vweird.f32 %v166
    %vm173 = vmor %vm171, %vm172
    %v174 = vsel %vm173, %v166, %v170
    %v175 = vand.u32 2147483647, %v165
    %vm176 = vcmp.eq.f32.partialorder %v175, 8.507059e+37
    %v177 = vand.u32 %v165, 2147483648
    %v178 = vor.u32 1.1754944e-38, %v177
    %v179 = vsel %vm176, %v178, %v174
    %v180 = vmul.f32 %v143, %v179
    %181 = vrot.lane.b32.xlu0 %v43, 32
    %v182 = vpop.permute.xlu0 %181
    %v184 = vsel %vm44, %v182, 0.0
    %185 = vadd.xlane.f32.xlu0 %v184
    %v186 = vpop.xlane.xlu0 %185
    %v187 = vmul.f32 %v186, %v54
    %v188 = vsub.f32 %v43, %v187
    %v189 = vmul.f32 %v188, %v188
    %191 = vrot.lane.b32.xlu0 %v189, 32
    %v192 = vpop.permute.xlu0 %191
    %v194 = vsel %vm44, %v192, 0.0
    %195 = vadd.xlane.f32.xlu0 %v194
    %v196 = vpop.xlane.xlu0 %195
    %v197 = vmul.f32 %v196, 0.032258064
    %v198 = vrsqrt.pop %v197
    %v199 = vmul.f32 %v198, %v197
    %v200 = vmul.f32 %v199, %v198
    %v201 = vmul.f32 0.5, %v200
    %v202 = vsub.f32 1.5, %v201
    %v203 = vmul.f32 %v198, %v202
    %v204 = vmul.f32 %v197, %v203
    %vm205 = vcmp.eq.f32.partialorder %v197, inf
    %v206 = vsel %vm205, %v197, %v204
    %vm207 = vcmp.eq.f32.partialorder %v197, 0.0
    %v208 = vand.u32 %v197, 2147483648
    %v209 = vsel %vm207, %v208, %v206
    %v210 = vadd.f32 %v209, 1e-05
    %v211 = vrcp.pop %v210
    %v212 = vmul.f32 %v210, %v211
    %v213 = vsub.f32 1.0, %v212
    %v214 = vmul.f32 %v211, %v213
    %v215 = vadd.f32 %v211, %v214
    %vm216 = vweird.f32 %v210
    %vm217 = vweird.f32 %v211
    %vm218 = vmor %vm216, %vm217
    %v219 = vsel %vm218, %v211, %v215
    %v220 = vand.u32 2147483647, %v210
    %vm221 = vcmp.eq.f32.partialorder %v220, 8.507059e+37
    %v222 = vand.u32 %v210, 2147483648
    %v223 = vor.u32 1.1754944e-38, %v222
    %v224 = vsel %vm221, %v223, %v219
    %v225 = vmul.f32 %v188, %v224
    %vm226 = vcmask 261120
    %v227 = vsel %vm226, %v89, %v135
    %vm228 = vcmask 523264
    %v229 = vsel %vm228, %v227, %v180
    %vm230 = vcmask 785408
    %v231 = vsel %vm230, %v229, %v225
    %v232 = vld [vmem:[#allocation5] sm:$0x1]
    %v234 = vperm.slane %v232, 0
    %v236 = vmul.f32 %v231, %v234
    %v237 = vld [vmem:[%s2] sm:$0x1]
    %v239 = vperm.slane %v237, 0
    %v241 = vadd.f32 %v236, %v239
    %242 = vst [vmem:[#allocation7] sm:$0xf] %v241
    // Predicated region
    $region22: #{tpu_custom_call.1} parent=1 // pred_check
      _
    $region23: #{tpu_custom_call.1} parent=1 // pred_check_branch
      %244 = sbr.rel (0) target = $region25
    $region24: #{tpu_custom_call.1} parent=1 // pred_region
      %246 = vsyncadd [#allocation4], 0
      %s248 = sshll.u32 [#allocation7], 4
      %s249 = int_to_ptr.vmem [resolvable:$true] %s248
      %s250 = sshll.u32 %s3, 4
      %s251 = int_to_ptr.hbm [resolvable:$true] %s250
      %253 = dma.vmem_to_hbm [thread:$0]  %s249, 64, %s251, [#allocation4]
    $region25: #{tpu_custom_call.1} parent=1 // pred_fallthru
      _
    // Predicated region
    $region26: #{tpu_custom_call.1} parent=1 // pred_check
      _
    $region27: #{tpu_custom_call.1} parent=1 // pred_check_branch
      %255 = sbr.rel (0) target = $region29
    $region28: #{tpu_custom_call.1} parent=1 // pred_region
      %257 = dma.done [#allocation4], 64
    $region29: #{tpu_custom_call.1} parent=1 // pred_fallthru
      _
    %258 = vsyncpa [#allocation3], 1
    %259 = vsyncpa [#allocation6], 1
    %260 = vsyncpa [#allocation4], 1

</llo_original>
